<compile_context>
chip_gen: v5e
topology: v5e:2x2
jax: 0.10.0
libtpu: 0.0.40
codegen_flags: <defaults>
</compile_context>

<pallas_src>
import jax
import jax.numpy as jnp
import numpy as np
from jax.experimental import pallas as pl
from jax.experimental.pallas import tpu as pltpu


_LANES = 512          # lane width of the packed slab (multiple of 128 -> lane-dense)
_SUBLANES = 8         # minimum sublane granularity for f32 tiles
_MAX_ROW_TILE = 512   # 512 rows x 512 lanes x 4 B = 1 MiB per array per buffer


def _spu(v):
    """SPU activation: v^2 - 0.5 for v >= 0, sigmoid(-v) - 1 for v < 0."""
    pos = v * v - 0.5
    denom = 1.0 + jnp.exp(v)            # sigmoid(-v) = 1 / (1 + exp(v))
    if denom.dtype == jnp.float32:
        inv = pl.reciprocal(denom)      # EUP reciprocal (exact)
    else:
        inv = 1.0 / denom
    return jnp.where(v >= 0.0, pos, inv - 1.0)


def _spu_transformer_kernel(x_ref, l_ref, u_ref, xout_ref, lout_ref, uout_ref):
    # x path: SPU(x), stored back in the input dtype.
    # TODO(synk): for bf16 inputs on v6e/v7x the f32 upcast could be skipped (bf16
    # VALU/EUP); kept in f32 so the same kernel is also correct/fast on v5e.
    x = x_ref[...].astype(jnp.float32)
    xout_ref[...] = _spu(x).astype(xout_ref.dtype)

    # Box-bound path: always f32 (output contract: torch.zeros -> float32).
    l = l_ref[...].astype(jnp.float32)
    u = u_ref[...].astype(jnp.float32)
    spu_l = _spu(l)
    spu_u = _spu(u)

    # l >= 0 : (spu(l), spu(u));  u <= 0 : (spu(u), spu(l));  else : (-0.5, max(spu(l), spu(u)))
    l_out = jnp.where(l >= 0.0, spu_l,
                      jnp.where(u <= 0.0, spu_u, jnp.full_like(l, -0.5)))
    u_out = jnp.where(l >= 0.0, spu_u,
                      jnp.where(u <= 0.0, spu_l, jnp.maximum(spu_l, spu_u)))

    lout_ref[...] = l_out
    uout_ref[...] = u_out


def _ceil_to(n, m):
    return -(-n // m) * m


def spu_layer_transformer(x, l_in, u_in):
    """x, l_in, u_in: (1, d) (any matching shape works). Returns (x_out, l_out, u_out)."""
    assert x.shape == l_in.shape == u_in.shape
    orig_shape = x.shape
    d = int(np.prod(orig_shape))

    # ---- pack into a sublane/lane-dense slab (rows, _LANES), rows % 8 == 0 ------------
    rows = _ceil_to(max(pl.cdiv(d, _LANES), _SUBLANES), _SUBLANES)
    row_tile = min(rows, _MAX_ROW_TILE)      # multiple of 8 by construction
    rows = _ceil_to(rows, row_tile)          # no partial blocks along the grid
    padded = rows * _LANES

    def pack(v):
        v = v.reshape(-1)
        if padded != d:
            v = jnp.pad(v, (0, padded - d))
        return v.reshape(rows, _LANES)

    xp, lp, up = pack(x), pack(l_in), pack(u_in)

    blk = (row_tile, _LANES)
    spec = pl.BlockSpec(blk, lambda i: (i, 0))

    out_shape = (
        jax.ShapeDtypeStruct((rows, _LANES), x.dtype),      # x_out keeps input dtype
        jax.ShapeDtypeStruct((rows, _LANES), jnp.float32),  # l_out
        jax.ShapeDtypeStruct((rows, _LANES), jnp.float32),  # u_out
    )

    # Advisory cost hint so XLA schedules/overlaps this cheap mem-bound call sensibly.
    bytes_accessed = padded * (2 * x.dtype.itemsize
                               + l_in.dtype.itemsize + u_in.dtype.itemsize
                               + 2 * 4)
    cost = pl.CostEstimate(flops=24 * padded,
                           transcendentals=3 * padded,
                           bytes_accessed=bytes_accessed)

    xo, lo, uo = pl.pallas_call(
        _spu_transformer_kernel,
        out_shape=out_shape,
        grid=(rows // row_tile,),
        in_specs=[spec, spec, spec],
        out_specs=(spec, spec, spec),
        compiler_params=pltpu.CompilerParams(
            dimension_semantics=("parallel",)),   # shard row tiles across v7x's 2 TCs
        cost_estimate=cost,
    )(xp, lp, up)

    def unpack(v):
        return v.reshape(-1)[:d].reshape(orig_shape)

    return unpack(xo), unpack(lo), unpack(uo)


def _reference(x, l_in, u_in):
    x = np.asarray(x, np.float32)
    l = np.asarray(l_in, np.float32)
    u = np.asarray(u_in, np.float32)

    def spu_np(v):
        return np.where(v >= 0.0, v * v - 0.5, 1.0 / (1.0 + np.exp(v)) - 1.0)

    x_out = spu_np(x)
    sl, su = spu_np(l), spu_np(u)
    l_out = np.where(l >= 0.0, sl, np.where(u <= 0.0, su, -0.5))
    u_out = np.where(l >= 0.0, su, np.where(u <= 0.0, sl, np.maximum(sl, su)))
    return x_out, l_out, u_out


if __name__ == "__main__":
    d = 32  # hidden size consistent with the module's (1, d_in) inputs
    key = jax.random.PRNGKey(0)
    kx, kr = jax.random.split(key)

    x = jax.random.uniform(kx, (1, d), jnp.float32, minval=-2.0, maxval=2.0)
    radius = jnp.abs(jax.random.uniform(kr, (1, d), jnp.float32, minval=0.0, maxval=1.0))
    l_in = x - radius  # guarantees l_in <= u_in (module asserts l <= u)
    u_in = x + radius

    x_out, l_out, u_out = spu_layer_transformer(x, l_in, u_in)
    jax.block_until_ready((x_out, l_out, u_out))

    rx, rl, ru = _reference(x, l_in, u_in)
    assert x_out.shape == (1, d) and l_out.shape == (1, d) and u_out.shape == (1, d)
    assert l_out.dtype == jnp.float32 and u_out.dtype == jnp.float32
    assert np.allclose(np.asarray(x_out), rx, atol=1e-5)
    assert np.allclose(np.asarray(l_out), rl, atol=1e-5)
    assert np.allclose(np.asarray(u_out), ru, atol=1e-5)

    print("KERNEL_OK")
</pallas_src>

<mosaic_0001>
module attributes {stable_mosaic.version = 11 : i64} {
  func.func @_spu_transformer_kernel(%arg0: i32, %arg1: memref<8x512xf32, #tpu.memory_space<vmem>>, %arg2: memref<8x512xf32, #tpu.memory_space<vmem>>, %arg3: memref<8x512xf32, #tpu.memory_space<vmem>>, %arg4: memref<8x512xf32, #tpu.memory_space<vmem>>, %arg5: memref<8x512xf32, #tpu.memory_space<vmem>>, %arg6: memref<8x512xf32, #tpu.memory_space<vmem>>) attributes {dimension_semantics = [#tpu.dimension_semantics<parallel>], iteration_bounds = array<i64: 1>, scalar_prefetch = 0 : i64, scratch_operands = 0 : i64, tpu.core_type = #tpu.core_type<tc>, window_params = [{transform_indices = @transform_0, window_bounds = array<i64: 8, 512>}, {transform_indices = @transform_1, window_bounds = array<i64: 8, 512>}, {transform_indices = @transform_2, window_bounds = array<i64: 8, 512>}, {transform_indices = @transform_3, window_bounds = array<i64: 8, 512>}, {transform_indices = @transform_4, window_bounds = array<i64: 8, 512>}, {transform_indices = @transform_5, window_bounds = array<i64: 8, 512>}]} {
    %c0 = arith.constant 0 : index
    %c0_0 = arith.constant 0 : index
    %0 = vector.load %arg1[%c0, %c0_0] : memref<8x512xf32, #tpu.memory_space<vmem>>, vector<8x512xf32>
    %1 = arith.mulf %0, %0 : vector<8x512xf32>
    %cst = arith.constant 5.000000e-01 : f32
    %2 = vector.broadcast %cst : f32 to vector<8x512xf32>
    %3 = arith.subf %1, %2 : vector<8x512xf32>
    %4 = math.exp %0 : vector<8x512xf32>
    %cst_1 = arith.constant 1.000000e+00 : f32
    %5 = vector.broadcast %cst_1 : f32 to vector<8x512xf32>
    %6 = arith.addf %5, %4 : vector<8x512xf32>
    %7 = tpu.reciprocal %6 : vector<8x512xf32> -> vector<8x512xf32>
    %cst_2 = arith.constant 0.000000e+00 : f32
    %8 = vector.broadcast %cst_2 : f32 to vector<8x512xf32>
    %9 = arith.cmpf oge, %0, %8 : vector<8x512xf32>
    %cst_3 = arith.constant 1.000000e+00 : f32
    %10 = vector.broadcast %cst_3 : f32 to vector<8x512xf32>
    %11 = arith.subf %7, %10 : vector<8x512xf32>
    %12 = arith.select %9, %3, %11 : vector<8x512xi1>, vector<8x512xf32>
    %c0_4 = arith.constant 0 : index
    %c0_5 = arith.constant 0 : index
    %13 = vector.load %arg4[%c0_4, %c0_5] : memref<8x512xf32, #tpu.memory_space<vmem>>, vector<8x512xf32>
    tpu.vector_store %arg4[%c0_4, %c0_5], %12 {strides = array<i32>} : memref<8x512xf32, #tpu.memory_space<vmem>>, vector<8x512xf32>,
    %c0_6 = arith.constant 0 : index
    %c0_7 = arith.constant 0 : index
    %14 = vector.load %arg2[%c0_6, %c0_7] : memref<8x512xf32, #tpu.memory_space<vmem>>, vector<8x512xf32>
    %c0_8 = arith.constant 0 : index
    %c0_9 = arith.constant 0 : index
    %15 = vector.load %arg3[%c0_8, %c0_9] : memref<8x512xf32, #tpu.memory_space<vmem>>, vector<8x512xf32>
    %16 = arith.mulf %14, %14 : vector<8x512xf32>
    %cst_10 = arith.constant 5.000000e-01 : f32
    %17 = vector.broadcast %cst_10 : f32 to vector<8x512xf32>
    %18 = arith.subf %16, %17 : vector<8x512xf32>
    %19 = math.exp %14 : vector<8x512xf32>
    %cst_11 = arith.constant 1.000000e+00 : f32
    %20 = vector.broadcast %cst_11 : f32 to vector<8x512xf32>
    %21 = arith.addf %20, %19 : vector<8x512xf32>
    %22 = tpu.reciprocal %21 : vector<8x512xf32> -> vector<8x512xf32>
    %cst_12 = arith.constant 0.000000e+00 : f32
    %23 = vector.broadcast %cst_12 : f32 to vector<8x512xf32>
    %24 = arith.cmpf oge, %14, %23 : vector<8x512xf32>
    %cst_13 = arith.constant 1.000000e+00 : f32
    %25 = vector.broadcast %cst_13 : f32 to vector<8x512xf32>
    %26 = arith.subf %22, %25 : vector<8x512xf32>
    %27 = arith.select %24, %18, %26 : vector<8x512xi1>, vector<8x512xf32>
    %28 = arith.mulf %15, %15 : vector<8x512xf32>
    %cst_14 = arith.constant 5.000000e-01 : f32
    %29 = vector.broadcast %cst_14 : f32 to vector<8x512xf32>
    %30 = arith.subf %28, %29 : vector<8x512xf32>
    %31 = math.exp %15 : vector<8x512xf32>
    %cst_15 = arith.constant 1.000000e+00 : f32
    %32 = vector.broadcast %cst_15 : f32 to vector<8x512xf32>
    %33 = arith.addf %32, %31 : vector<8x512xf32>
    %34 = tpu.reciprocal %33 : vector<8x512xf32> -> vector<8x512xf32>
    %cst_16 = arith.constant 0.000000e+00 : f32
    %35 = vector.broadcast %cst_16 : f32 to vector<8x512xf32>
    %36 = arith.cmpf oge, %15, %35 : vector<8x512xf32>
    %cst_17 = arith.constant 1.000000e+00 : f32
    %37 = vector.broadcast %cst_17 : f32 to vector<8x512xf32>
    %38 = arith.subf %34, %37 : vector<8x512xf32>
    %39 = arith.select %36, %30, %38 : vector<8x512xi1>, vector<8x512xf32>
    %cst_18 = arith.constant 0.000000e+00 : f32
    %40 = vector.broadcast %cst_18 : f32 to vector<8x512xf32>
    %41 = arith.cmpf oge, %14, %40 : vector<8x512xf32>
    %cst_19 = arith.constant 0.000000e+00 : f32
    %42 = vector.broadcast %cst_19 : f32 to vector<8x512xf32>
    %43 = arith.cmpf ole, %15, %42 : vector<8x512xf32>
    %cst_20 = arith.constant -5.000000e-01 : f32
    %44 = vector.broadcast %cst_20 : f32 to vector<8x512xf32>
    %45 = arith.select %43, %39, %44 : vector<8x512xi1>, vector<8x512xf32>
    %46 = arith.select %41, %27, %45 : vector<8x512xi1>, vector<8x512xf32>
    %cst_21 = arith.constant 0.000000e+00 : f32
    %47 = vector.broadcast %cst_21 : f32 to vector<8x512xf32>
    %48 = arith.cmpf oge, %14, %47 : vector<8x512xf32>
    %cst_22 = arith.constant 0.000000e+00 : f32
    %49 = vector.broadcast %cst_22 : f32 to vector<8x512xf32>
    %50 = arith.cmpf ole, %15, %49 : vector<8x512xf32>
    %51 = arith.maximumf %27, %39 : vector<8x512xf32>
    %52 = arith.select %50, %27, %51 : vector<8x512xi1>, vector<8x512xf32>
    %53 = arith.select %48, %39, %52 : vector<8x512xi1>, vector<8x512xf32>
    %c0_23 = arith.constant 0 : index
    %c0_24 = arith.constant 0 : index
    %54 = vector.load %arg5[%c0_23, %c0_24] : memref<8x512xf32, #tpu.memory_space<vmem>>, vector<8x512xf32>
    tpu.vector_store %arg5[%c0_23, %c0_24], %46 {strides = array<i32>} : memref<8x512xf32, #tpu.memory_space<vmem>>, vector<8x512xf32>,
    %c0_25 = arith.constant 0 : index
    %c0_26 = arith.constant 0 : index
    %55 = vector.load %arg6[%c0_25, %c0_26] : memref<8x512xf32, #tpu.memory_space<vmem>>, vector<8x512xf32>
    tpu.vector_store %arg6[%c0_25, %c0_26], %53 {strides = array<i32>} : memref<8x512xf32, #tpu.memory_space<vmem>>, vector<8x512xf32>,
    return
  }
  func.func @transform_0(%arg0: i32) -> (i32, i32) {
    %c0_i32 = arith.constant 0 : i32
    %c0_i32_0 = arith.constant 0 : i32
    return %arg0, %c0_i32 : i32, i32
  }
  func.func @transform_1(%arg0: i32) -> (i32, i32) {
    %c0_i32 = arith.constant 0 : i32
    %c0_i32_0 = arith.constant 0 : i32
    return %arg0, %c0_i32 : i32, i32
  }
  func.func @transform_2(%arg0: i32) -> (i32, i32) {
    %c0_i32 = arith.constant 0 : i32
    %c0_i32_0 = arith.constant 0 : i32
    return %arg0, %c0_i32 : i32, i32
  }
  func.func @transform_3(%arg0: i32) -> (i32, i32) {
    %c0_i32 = arith.constant 0 : i32
    %c0_i32_0 = arith.constant 0 : i32
    return %arg0, %c0_i32 : i32, i32
  }
  func.func @transform_4(%arg0: i32) -> (i32, i32) {
    %c0_i32 = arith.constant 0 : i32
    %c0_i32_0 = arith.constant 0 : i32
    return %arg0, %c0_i32 : i32, i32
  }
  func.func @transform_5(%arg0: i32) -> (i32, i32) {
    %c0_i32 = arith.constant 0 : i32
    %c0_i32_0 = arith.constant 0 : i32
    return %arg0, %c0_i32 : i32, i32
  }
}

</mosaic_0001>

<llo_original>
// kernel: tpu_custom_call.1
$region0: #{tpu_custom_call.1}
  #allocation0 [shape = 'u32[]', space=smem, size = 0x4, offset = 0x4, fixed_abs, tag = 'smem constant byte address 0x4 - core index']
  #allocation1 [shape = 'u32[72,128]{1,0:T(1,128)}', space=vmem, size = 0x9000, scoped, tag = 'internal scratch']
  %s0 = inlined_call_operand.hbm [shape: f32[8,512], index: 0, kind: input, shape index: {}]
  %s1 = inlined_call_operand.hbm [shape: f32[8,512], index: 1, kind: input, shape index: {}]
  %s2 = inlined_call_operand.hbm [shape: f32[8,512], index: 2, kind: input, shape index: {}]
  %s3 = inlined_call_operand.hbm [shape: f32[8,512], index: 3, kind: output, shape index: {0}]
  %s4 = inlined_call_operand.hbm [shape: f32[8,512], index: 4, kind: output, shape index: {1}]
  %s5 = inlined_call_operand.hbm [shape: f32[8,512], index: 5, kind: output, shape index: {2}]
  %6 = xla_tuple %s3, %s4, %s5
  %s7 = sld [smem:[#allocation0]]
  $region50: #{tpu_custom_call.1} parent=0
    _
  %s9 = ssub.s32 1, %s7
  %s10 = scalar_select 0, %s9, %s7
  $region1: #{tpu_custom_call.1} parent=0
    #allocation2 [shape = 'u8[16384]{0}', space=vmem, size = 0x4000, scoped, tag = 'input window, operand 0, single buffered']
    #allocation3 [shape = 's32[1]{0}', space=sflag, size = 0x4, scoped, tag = 'scoped memory for tpu_custom_call.1']
    #allocation4 [shape = 's32[1]{0}', space=sflag, size = 0x4, scoped, tag = 'scoped memory for tpu_custom_call.1']
    #allocation5 [shape = 'u8[16384]{0}', space=vmem, size = 0x4000, scoped, tag = 'input window, operand 1, single buffered']
    #allocation6 [shape = 's32[1]{0}', space=sflag, size = 0x4, scoped, tag = 'scoped memory for tpu_custom_call.1']
    #allocation7 [shape = 'u8[16384]{0}', space=vmem, size = 0x4000, scoped, tag = 'input window, operand 2, single buffered']
    #allocation8 [shape = 'u8[16384]{0}', space=vmem, size = 0x4000, scoped, tag = 'output window, operand 0, single buffered']
    #allocation9 [shape = 'u8[16384]{0}', space=vmem, size = 0x4000, scoped, tag = 'output window, operand 1, single buffered']
    #allocation10 [shape = 's32[1]{0}', space=sflag, size = 0x4, scoped, tag = 'scoped memory for tpu_custom_call.1']
    #allocation11 [shape = 'u8[16384]{0}', space=vmem, size = 0x4000, scoped, tag = 'output window, operand 2, single buffered']
    %11 = vsyncpa [#allocation3], 0
    %12 = vsyncpa [#allocation6], 0
    %13 = vsyncpa [#allocation4], 0
    %14 = vsyncpa [#allocation10], 0
    // Predicated region
    $region2: #{tpu_custom_call.1} parent=1 // pred_check
      _
    $region3: #{tpu_custom_call.1} parent=1 // pred_check_branch
      %16 = sbr.rel (0) target = $region5
    $region4: #{tpu_custom_call.1} parent=1 // pred_region
      %18 = vsyncadd [#allocation3], 0
      %s20 = sshll.u32 %s0, 4
      %s21 = int_to_ptr.hbm [resolvable:$true] %s20
      %s22 = sshll.u32 [#allocation2], 4
      %s23 = int_to_ptr.vmem [resolvable:$true] %s22
      %25 = dma.hbm_to_vmem [thread:$0]  %s21, 512, %s23, [#allocation3]
    $region5: #{tpu_custom_call.1} parent=1 // pred_fallthru
      _
    // Predicated region
    $region6: #{tpu_custom_call.1} parent=1 // pred_check
      _
    $region7: #{tpu_custom_call.1} parent=1 // pred_check_branch
      %27 = sbr.rel (0) target = $region9
    $region8: #{tpu_custom_call.1} parent=1 // pred_region
      %29 = vsyncadd [#allocation6], 0
      %s31 = sshll.u32 %s1, 4
      %s32 = int_to_ptr.hbm [resolvable:$true] %s31
      %s33 = sshll.u32 [#allocation5], 4
      %s34 = int_to_ptr.vmem [resolvable:$true] %s33
      %36 = dma.hbm_to_vmem [thread:$0]  %s32, 512, %s34, [#allocation6]
    $region9: #{tpu_custom_call.1} parent=1 // pred_fallthru
      _
    // Predicated region
    $region10: #{tpu_custom_call.1} parent=1 // pred_check
      _
    $region11: #{tpu_custom_call.1} parent=1 // pred_check_branch
      %38 = sbr.rel (0) target = $region13
    $region12: #{tpu_custom_call.1} parent=1 // pred_region
      %40 = vsyncadd [#allocation6], 0
      %s42 = sshll.u32 %s2, 4
      %s43 = int_to_ptr.hbm [resolvable:$true] %s42
      %s44 = sshll.u32 [#allocation7], 4
      %s45 = int_to_ptr.vmem [resolvable:$true] %s44
      %47 = dma.hbm_to_vmem [thread:$0]  %s43, 512, %s45, [#allocation6]
    $region13: #{tpu_custom_call.1} parent=1 // pred_fallthru
      _
    // Predicated region
    $region14: #{tpu_custom_call.1} parent=1 // pred_check
      _
    $region15: #{tpu_custom_call.1} parent=1 // pred_check_branch
      %49 = sbr.rel (0) target = $region17
    $region16: #{tpu_custom_call.1} parent=1 // pred_region
      %51 = dma.done [#allocation3], 512
    $region17: #{tpu_custom_call.1} parent=1 // pred_fallthru
      _
    // Predicated region
    $region18: #{tpu_custom_call.1} parent=1 // pred_check
      _
    $region19: #{tpu_custom_call.1} parent=1 // pred_check_branch
      %53 = sbr.rel (0) target = $region21
    $region20: #{tpu_custom_call.1} parent=1 // pred_region
      %55 = dma.done [#allocation6], 512
    $region21: #{tpu_custom_call.1} parent=1 // pred_fallthru
      _
    // Predicated region
    $region22: #{tpu_custom_call.1} parent=1 // pred_check
      _
    $region23: #{tpu_custom_call.1} parent=1 // pred_check_branch
      %57 = sbr.rel (0) target = $region25
    $region24: #{tpu_custom_call.1} parent=1 // pred_region
      %59 = dma.done [#allocation6], 512
    $region25: #{tpu_custom_call.1} parent=1 // pred_fallthru
      _
    %v60 = vld [vmem:[#allocation2] sm:$0xff]
    %v61 = vld [vmem:[#allocation2 + $0x8] sm:$0xff]
    %v62 = vld [vmem:[#allocation2 + $0x10] sm:$0xff]
    %v63 = vld [vmem:[#allocation2 + $0x18] sm:$0xff]
    %v64 = vmul.f32 %v60, %v60
    %v65 = vmul.f32 %v61, %v61
    %v66 = vmul.f32 %v62, %v62
    %v67 = vmul.f32 %v63, %v63
    %v68 = vsub.f32 %v64, 0.5
    %v69 = vsub.f32 %v65, 0.5
    %v70 = vsub.f32 %v66, 0.5
    %v71 = vsub.f32 %v67, 0.5
    %v72 = vmul.f32 %v60, 1.442695
    %v73 = vpow.pop %v72
    %v74 = vmul.f32 %v61, 1.442695
    %v75 = vpow.pop %v74
    %v76 = vmul.f32 %v62, 1.442695
    %v77 = vpow.pop %v76
    %v78 = vmul.f32 %v63, 1.442695
    %v79 = vpow.pop %v78
    %v80 = vadd.f32 %v73, 1.0
    %v81 = vadd.f32 %v75, 1.0
    %v82 = vadd.f32 %v77, 1.0
    %v83 = vadd.f32 %v79, 1.0
    %v84 = vrcp.pop %v80
    %v85 = vmul.f32 %v80, %v84
    %v86 = vsub.f32 1.0, %v85
    %v87 = vmul.f32 %v84, %v86
    %v88 = vadd.f32 %v84, %v87
    %vm89 = vweird.f32 %v80
    %vm90 = vweird.f32 %v84
    %vm91 = vmor %vm89, %vm90
    %v92 = vsel %vm91, %v84, %v88
    %v93 = vand.u32 2147483647, %v80
    %vm94 = vcmp.eq.f32.partialorder %v93, 8.507059e+37
    %v95 = vand.u32 %v80, 2147483648
    %v96 = vor.u32 1.1754944e-38, %v95
    %v97 = vsel %vm94, %v96, %v92
    %v98 = vrcp.pop %v81
    %v99 = vmul.f32 %v81, %v98
    %v100 = vsub.f32 1.0, %v99
    %v101 = vmul.f32 %v98, %v100
    %v102 = vadd.f32 %v98, %v101
    %vm103 = vweird.f32 %v81
    %vm104 = vweird.f32 %v98
    %vm105 = vmor %vm103, %vm104
    %v106 = vsel %vm105, %v98, %v102
    %v107 = vand.u32 2147483647, %v81
    %vm108 = vcmp.eq.f32.partialorder %v107, 8.507059e+37
    %v109 = vand.u32 %v81, 2147483648
    %v110 = vor.u32 1.1754944e-38, %v109
    %v111 = vsel %vm108, %v110, %v106
    %v112 = vrcp.pop %v82
    %v113 = vmul.f32 %v82, %v112
    %v114 = vsub.f32 1.0, %v113
    %v115 = vmul.f32 %v112, %v114
    %v116 = vadd.f32 %v112, %v115
    %vm117 = vweird.f32 %v82
    %vm118 = vweird.f32 %v112
    %vm119 = vmor %vm117, %vm118
    %v120 = vsel %vm119, %v112, %v116
    %v121 = vand.u32 2147483647, %v82
    %vm122 = vcmp.eq.f32.partialorder %v121, 8.507059e+37
    %v123 = vand.u32 %v82, 2147483648
    %v124 = vor.u32 1.1754944e-38, %v123
    %v125 = vsel %vm122, %v124, %v120
    %v126 = vrcp.pop %v83
    %v127 = vmul.f32 %v83, %v126
    %v128 = vsub.f32 1.0, %v127
    %v129 = vmul.f32 %v126, %v128
    %v130 = vadd.f32 %v126, %v129
    %vm131 = vweird.f32 %v83
    %vm132 = vweird.f32 %v126
    %vm133 = vmor %vm131, %vm132
    %v134 = vsel %vm133, %v126, %v130
    %v135 = vand.u32 2147483647, %v83
    %vm136 = vcmp.eq.f32.partialorder %v135, 8.507059e+37
    %v137 = vand.u32 %v83, 2147483648
    %v138 = vor.u32 1.1754944e-38, %v137
    %v139 = vsel %vm136, %v138, %v134
    %vm140 = vcmp.ge.f32.partialorder %v60, 0.0
    %vm141 = vcmp.ge.f32.partialorder %v61, 0.0
    %vm142 = vcmp.ge.f32.partialorder %v62, 0.0
    %vm143 = vcmp.ge.f32.partialorder %v63, 0.0
    %v144 = vsub.f32 %v97, 1.0
    %v145 = vsub.f32 %v111, 1.0
    %v146 = vsub.f32 %v125, 1.0
    %v147 = vsub.f32 %v139, 1.0
    %v148 = vsel %vm140, %v68, %v144
    %v149 = vsel %vm141, %v69, %v145
    %v150 = vsel %vm142, %v70, %v146
    %v151 = vsel %vm143, %v71, %v147
    %152 = vst [vmem:[#allocation8] sm:$0xff] %v148
    %153 = vst [vmem:[#allocation8 + $0x8] sm:$0xff] %v149
    %154 = vst [vmem:[#allocation8 + $0x10] sm:$0xff] %v150
    %155 = vst [vmem:[#allocation8 + $0x18] sm:$0xff] %v151
    %v156 = vld [vmem:[#allocation5] sm:$0xff]
    %v157 = vld [vmem:[#allocation5 + $0x8] sm:$0xff]
    %v158 = vld [vmem:[#allocation5 + $0x10] sm:$0xff]
    %v159 = vld [vmem:[#allocation5 + $0x18] sm:$0xff]
    %v160 = vld [vmem:[#allocation7] sm:$0xff]
    %v161 = vld [vmem:[#allocation7 + $0x8] sm:$0xff]
    %v162 = vld [vmem:[#allocation7 + $0x10] sm:$0xff]
    %v163 = vld [vmem:[#allocation7 + $0x18] sm:$0xff]
    %v164 = vmul.f32 %v156, %v156
    %v165 = vmul.f32 %v157, %v157
    %v166 = vmul.f32 %v158, %v158
    %v167 = vmul.f32 %v159, %v159
    %v168 = vsub.f32 %v164, 0.5
    %v169 = vsub.f32 %v165, 0.5
    %v170 = vsub.f32 %v166, 0.5
    %v171 = vsub.f32 %v167, 0.5
    %v172 = vmul.f32 %v156, 1.442695
    %v173 = vpow.pop %v172
    %v174 = vmul.f32 %v157, 1.442695
    %v175 = vpow.pop %v174
    %v176 = vmul.f32 %v158, 1.442695
    %v177 = vpow.pop %v176
    %v178 = vmul.f32 %v159, 1.442695
    %v179 = vpow.pop %v178
    %v180 = vadd.f32 %v173, 1.0
    %v181 = vadd.f32 %v175, 1.0
    %v182 = vadd.f32 %v177, 1.0
    %v183 = vadd.f32 %v179, 1.0
    %v184 = vrcp.pop %v180
    %v185 = vmul.f32 %v180, %v184
    %v186 = vsub.f32 1.0, %v185
    %v187 = vmul.f32 %v184, %v186
    %v188 = vadd.f32 %v184, %v187
    %vm189 = vweird.f32 %v180
    %vm190 = vweird.f32 %v184
    %vm191 = vmor %vm189, %vm190
    %v192 = vsel %vm191, %v184, %v188
    %v193 = vand.u32 2147483647, %v180
    %vm194 = vcmp.eq.f32.partialorder %v193, 8.507059e+37
    %v195 = vand.u32 %v180, 2147483648
    %v196 = vor.u32 1.1754944e-38, %v195
    %v197 = vsel %vm194, %v196, %v192
    %v198 = vrcp.pop %v181
    %v199 = vmul.f32 %v181, %v198
    %v200 = vsub.f32 1.0, %v199
    %v201 = vmul.f32 %v198, %v200
    %v202 = vadd.f32 %v198, %v201
    %vm203 = vweird.f32 %v181
    %vm204 = vweird.f32 %v198
    %vm205 = vmor %vm203, %vm204
    %v206 = vsel %vm205, %v198, %v202
    %v207 = vand.u32 2147483647, %v181
    %vm208 = vcmp.eq.f32.partialorder %v207, 8.507059e+37
    %v209 = vand.u32 %v181, 2147483648
    %v210 = vor.u32 1.1754944e-38, %v209
    %v211 = vsel %vm208, %v210, %v206
    %v212 = vrcp.pop %v182
    %v213 = vmul.f32 %v182, %v212
    %v214 = vsub.f32 1.0, %v213
    %v215 = vmul.f32 %v212, %v214
    %v216 = vadd.f32 %v212, %v215
    %vm217 = vweird.f32 %v182
    %vm218 = vweird.f32 %v212
    %vm219 = vmor %vm217, %vm218
    %v220 = vsel %vm219, %v212, %v216
    %v221 = vand.u32 2147483647, %v182
    %vm222 = vcmp.eq.f32.partialorder %v221, 8.507059e+37
    %v223 = vand.u32 %v182, 2147483648
    %v224 = vor.u32 1.1754944e-38, %v223
    %v225 = vsel %vm222, %v224, %v220
    %v226 = vrcp.pop %v183
    %v227 = vmul.f32 %v183, %v226
    %v228 = vsub.f32 1.0, %v227
    %v229 = vmul.f32 %v226, %v228
    %v230 = vadd.f32 %v226, %v229
    %vm231 = vweird.f32 %v183
    %vm232 = vweird.f32 %v226
    %vm233 = vmor %vm231, %vm232
    %v234 = vsel %vm233, %v226, %v230
    %v235 = vand.u32 2147483647, %v183
    %vm236 = vcmp.eq.f32.partialorder %v235, 8.507059e+37
    %v237 = vand.u32 %v183, 2147483648
    %v238 = vor.u32 1.1754944e-38, %v237
    %v239 = vsel %vm236, %v238, %v234
    %vm240 = vcmp.ge.f32.partialorder %v156, 0.0
    %vm241 = vcmp.ge.f32.partialorder %v157, 0.0
    %vm242 = vcmp.ge.f32.partialorder %v158, 0.0
    %vm243 = vcmp.ge.f32.partialorder %v159, 0.0
    %v244 = vsub.f32 %v197, 1.0
    %v245 = vsub.f32 %v211, 1.0
    %v246 = vsub.f32 %v225, 1.0
    %v247 = vsub.f32 %v239, 1.0
    %v248 = vsel %vm240, %v168, %v244
    %v249 = vsel %vm241, %v169, %v245
    %v250 = vsel %vm242, %v170, %v246
    %v251 = vsel %vm243, %v171, %v247
    %v252 = vmul.f32 %v160, %v160
    %v253 = vmul.f32 %v161, %v161
    %v254 = vmul.f32 %v162, %v162
    %v255 = vmul.f32 %v163, %v163
    %v256 = vsub.f32 %v252, 0.5
    %v257 = vsub.f32 %v253, 0.5
    %v258 = vsub.f32 %v254, 0.5
    %v259 = vsub.f32 %v255, 0.5
    %v260 = vmul.f32 %v160, 1.442695
    %v261 = vpow.pop %v260
    %v262 = vmul.f32 %v161, 1.442695
    %v263 = vpow.pop %v262
    %v264 = vmul.f32 %v162, 1.442695
    %v265 = vpow.pop %v264
    %v266 = vmul.f32 %v163, 1.442695
    %v267 = vpow.pop %v266
    %v268 = vadd.f32 %v261, 1.0
    %v269 = vadd.f32 %v263, 1.0
    %v270 = vadd.f32 %v265, 1.0
    %v271 = vadd.f32 %v267, 1.0
    %v272 = vrcp.pop %v268
    %v273 = vmul.f32 %v268, %v272
    %v274 = vsub.f32 1.0, %v273
    %v275 = vmul.f32 %v272, %v274
    %v276 = vadd.f32 %v272, %v275
    %vm277 = vweird.f32 %v268
    %vm278 = vweird.f32 %v272
    %vm279 = vmor %vm277, %vm278
    %v280 = vsel %vm279, %v272, %v276
    %v281 = vand.u32 2147483647, %v268
    %vm282 = vcmp.eq.f32.partialorder %v281, 8.507059e+37
    %v283 = vand.u32 %v268, 2147483648
    %v284 = vor.u32 1.1754944e-38, %v283
    %v285 = vsel %vm282, %v284, %v280
    %v286 = vrcp.pop %v269
    %v287 = vmul.f32 %v269, %v286
    %v288 = vsub.f32 1.0, %v287
    %v289 = vmul.f32 %v286, %v288
    %v290 = vadd.f32 %v286, %v289
    %vm291 = vweird.f32 %v269
    %vm292 = vweird.f32 %v286
    %vm293 = vmor %vm291, %vm292
    %v294 = vsel %vm293, %v286, %v290
    %v295 = vand.u32 2147483647, %v269
    %vm296 = vcmp.eq.f32.partialorder %v295, 8.507059e+37
    %v297 = vand.u32 %v269, 2147483648
    %v298 = vor.u32 1.1754944e-38, %v297
    %v299 = vsel %vm296, %v298, %v294
    %v300 = vrcp.pop %v270
    %v301 = vmul.f32 %v270, %v300
    %v302 = vsub.f32 1.0, %v301
    %v303 = vmul.f32 %v300, %v302
    %v304 = vadd.f32 %v300, %v303
    %vm305 = vweird.f32 %v270
    %vm306 = vweird.f32 %v300
    %vm307 = vmor %vm305, %vm306
    %v308 = vsel %vm307, %v300, %v304
    %v309 = vand.u32 2147483647, %v270
    %vm310 = vcmp.eq.f32.partialorder %v309, 8.507059e+37
    %v311 = vand.u32 %v270, 2147483648
    %v312 = vor.u32 1.1754944e-38, %v311
    %v313 = vsel %vm310, %v312, %v308
    %v314 = vrcp.pop %v271
    %v315 = vmul.f32 %v271, %v314
    %v316 = vsub.f32 1.0, %v315
    %v317 = vmul.f32 %v314, %v316
    %v318 = vadd.f32 %v314, %v317
    %vm319 = vweird.f32 %v271
    %vm320 = vweird.f32 %v314
    %vm321 = vmor %vm319, %vm320
    %v322 = vsel %vm321, %v314, %v318
    %v323 = vand.u32 2147483647, %v271
    %vm324 = vcmp.eq.f32.partialorder %v323, 8.507059e+37
    %v325 = vand.u32 %v271, 2147483648
    %v326 = vor.u32 1.1754944e-38, %v325
    %v327 = vsel %vm324, %v326, %v322
    %vm328 = vcmp.ge.f32.partialorder %v160, 0.0
    %vm329 = vcmp.ge.f32.partialorder %v161, 0.0
    %vm330 = vcmp.ge.f32.partialorder %v162, 0.0
    %vm331 = vcmp.ge.f32.partialorder %v163, 0.0
    %v332 = vsub.f32 %v285, 1.0
    %v333 = vsub.f32 %v299, 1.0
    %v334 = vsub.f32 %v313, 1.0
    %v335 = vsub.f32 %v327, 1.0
    %v336 = vsel %vm328, %v256, %v332
    %v337 = vsel %vm329, %v257, %v333
    %v338 = vsel %vm330, %v258, %v334
    %v339 = vsel %vm331, %v259, %v335
    %vm340 = vcmp.le.f32.partialorder %v160, 0.0
    %vm341 = vcmp.le.f32.partialorder %v161, 0.0
    %vm342 = vcmp.le.f32.partialorder %v162, 0.0
    %vm343 = vcmp.le.f32.partialorder %v163, 0.0
    %v344 = vsel %vm340, %v336, -0.5
    %v345 = vsel %vm341, %v337, -0.5
    %v346 = vsel %vm342, %v338, -0.5
    %v347 = vsel %vm343, %v339, -0.5
    %v348 = vsel %vm240, %v168, %v344
    %v349 = vsel %vm241, %v169, %v345
    %v350 = vsel %vm242, %v170, %v346
    %v351 = vsel %vm243, %v171, %v347
    %v352 = vmax.f32 %v248, %v336
    %v353 = vmax.f32 %v249, %v337
    %v354 = vmax.f32 %v250, %v338
    %v355 = vmax.f32 %v251, %v339
    %v356 = vsel %vm340, %v248, %v352
    %v357 = vsel %vm341, %v249, %v353
    %v358 = vsel %vm342, %v250, %v354
    %v359 = vsel %vm343, %v251, %v355
    %v360 = vsel %vm240, %v336, %v356
    %v361 = vsel %vm241, %v337, %v357
    %v362 = vsel %vm242, %v338, %v358
    %v363 = vsel %vm243, %v339, %v359
    %364 = vst [vmem:[#allocation9] sm:$0xff] %v348
    %365 = vst [vmem:[#allocation9 + $0x8] sm:$0xff] %v349
    %366 = vst [vmem:[#allocation9 + $0x10] sm:$0xff] %v350
    %367 = vst [vmem:[#allocation9 + $0x18] sm:$0xff] %v351
    %368 = vst [vmem:[#allocation11] sm:$0xff] %v360
    %369 = vst [vmem:[#allocation11 + $0x8] sm:$0xff] %v361
    %370 = vst [vmem:[#allocation11 + $0x10] sm:$0xff] %v362
    %371 = vst [vmem:[#allocation11 + $0x18] sm:$0xff] %v363
    // Predicated region
    $region26: #{tpu_custom_call.1} parent=1 // pred_check
      _
    $region27: #{tpu_custom_call.1} parent=1 // pred_check_branch
      %373 = sbr.rel (0) target = $region29
    $region28: #{tpu_custom_call.1} parent=1 // pred_region
      %375 = vsyncadd [#allocation4], 0
      %s377 = sshll.u32 [#allocation8], 4
      %s378 = int_to_ptr.vmem [resolvable:$true] %s377
      %s379 = sshll.u32 %s3, 4
      %s380 = int_to_ptr.hbm [resolvable:$true] %s379
      %382 = dma.vmem_to_hbm [thread:$0]  %s378, 512, %s380, [#allocation4]
    $region29: #{tpu_custom_call.1} parent=1 // pred_fallthru
      _
    // Predicated region
    $region30: #{tpu_custom_call.1} parent=1 // pred_check
      _
    $region31: #{tpu_custom_call.1} parent=1 // pred_check_branch
      %384 = sbr.rel (0) target = $region33
    $region32: #{tpu_custom_call.1} parent=1 // pred_region
      %386 = vsyncadd [#allocation10], 0
      %s388 = sshll.u32 [#allocation9], 4
      %s389 = int_to_ptr.vmem [resolvable:$true] %s388
      %s390 = sshll.u32 %s4, 4
      %s391 = int_to_ptr.hbm [resolvable:$true] %s390
      %393 = dma.vmem_to_hbm [thread:$0]  %s389, 512, %s391, [#allocation10]
    $region33: #{tpu_custom_call.1} parent=1 // pred_fallthru
      _
    // Predicated region
    $region34: #{tpu_custom_call.1} parent=1 // pred_check
      _
    $region35: #{tpu_custom_call.1} parent=1 // pred_check_branch
      %395 = sbr.rel (0) target = $region37
    $region36: #{tpu_custom_call.1} parent=1 // pred_region
      %397 = vsyncadd [#allocation10], 0
      %s399 = sshll.u32 [#allocation11], 4
      %s400 = int_to_ptr.vmem [resolvable:$true] %s399
      %s401 = sshll.u32 %s5, 4
      %s402 = int_to_ptr.hbm [resolvable:$true] %s401
      %404 = dma.vmem_to_hbm [thread:$0]  %s400, 512, %s402, [#allocation10]
    $region37: #{tpu_custom_call.1} parent=1 // pred_fallthru
      _
    // Predicated region
    $region38: #{tpu_custom_call.1} parent=1 // pred_check
      _
    $region39: #{tpu_custom_call.1} parent=1 // pred_check_branch
      %406 = sbr.rel (0) target = $region41
    $region40: #{tpu_custom_call.1} parent=1 // pred_region
      %408 = dma.done [#allocation4], 512
    $region41: #{tpu_custom_call.1} parent=1 // pred_fallthru
      _
    // Predicated region
    $region42: #{tpu_custom_call.1} parent=1 // pred_check
      _
    $region43: #{tpu_custom_call.1} parent=1 // pred_check_branch
      %410 = sbr.rel (0) target = $region45
    $region44: #{tpu_custom_call.1} parent=1 // pred_region
      %412 = dma.done [#allocation10], 512
    $region45: #{tpu_custom_call.1} parent=1 // pred_fallthru
      _
    // Predicated region
    $region46: #{tpu_custom_call.1} parent=1 // pred_check
      _
    $region47: #{tpu_custom_call.1} parent=1 // pred_check_branch
      %414 = sbr.rel (0) target = $region49
    $region48: #{tpu_custom_call.1} parent=1 // pred_region
      %416 = dma.done [#allocation10], 512
    $region49: #{tpu_custom_call.1} parent=1 // pred_fallthru
      _
    %417 = vsyncpa [#allocation3], 1
    %418 = vsyncpa [#allocation6], 1
    %419 = vsyncpa [#allocation4], 1
    %420 = vsyncpa [#allocation10], 1

</llo_original>
